<compile_context>
chip_gen: v7x
topology: tpu7x:2x2x1
jax: 0.10.0
libtpu: 0.0.40
codegen_flags: <defaults>
</compile_context>

<pallas_src>
import functools

import jax
import jax.numpy as jnp
from jax.experimental import pallas as pl
from jax.experimental.pallas import tpu as pltpu

LN_EPS = 1e-5


def _round_up(x, m):
    return ((x + m - 1) // m) * m


def _pick_row_tile(n_rows, cap, min_tiles):
    """Pick the super-row tile size.

    Prefers a tile that divides n_rows exactly (no pad / output slice) and is a
    multiple of 8 (sublane rule) or the full extent; honors min_tiles (>= 2 when
    B == 1 so both v7x TensorCores get work).  Returns (tile, padded_n_rows)."""
    cands = []
    if n_rows <= cap:
        cands.append(n_rows)
    cands += [d for d in range(8, min(n_rows, cap) + 1, 8) if n_rows % d == 0]
    if min_tiles > 1:
        pref = [d for d in cands if n_rows // d >= min_tiles]
        if pref:
            cands = pref
    if cands:
        return max(cands), n_rows
    # Rare fallback: pad the packed row axis.  Padded rows give h == b1, so
    # var ~ 0 and hn ~ +/- 1/sqrt(eps): finite garbage, sliced off below, at the
    # cost of an extra HBM pass for the pad + slice.
    t = max(8, (min(cap, _round_up(n_rows, 8)) // 8) * 8)
    return t, _round_up(n_rows, t)


def todist_kernel(x_ref, w1_ref, b1_ref, seg_ref, w2_ref, b2_ref, o_ref, *,
                  compute_dtype):
    # x tile: (tms, P*A) packed super-rows.
    xp = x_ref[0]
    if compute_dtype is not None:
        xp = xp.astype(compute_dtype)  # in-kernel cast: free on the VPU.

    # lin1 on the MXU (block-diagonal weights => P logical rows per super-row),
    # f32 accumulation; bias and everything downstream in f32.
    h = jnp.dot(xp, w1_ref[...], preferred_element_type=jnp.float32) + b1_ref[...]

    # Segmented (per logical A-channel row) LayerNorm statistics.  Both
    # reductions go to the MXU back-to-back (block 1/A ones matrix), no XLU
    # cross-lane reduce, no mean->center->var chain:  var = E[h^2] - E[h]^2.
    mean = jnp.dot(h, seg_ref[...], preferred_element_type=jnp.float32)
    ex2 = jnp.dot(h * h, seg_ref[...], preferred_element_type=jnp.float32)
    var = ex2 - mean * mean
    hn = (h - mean) * jax.lax.rsqrt(var + LN_EPS)

    # lin2 (LN gamma/beta already folded into w2/b2): plain row-major dot, no
    # transposed operand anywhere in the kernel.
    y = jnp.dot(hn.astype(w2_ref.dtype), w2_ref[...],
                preferred_element_type=jnp.float32) + b2_ref[...]
    o_ref[0] = y.astype(o_ref.dtype)


def todist_pallas(x_bhwc, w1, b1, gamma, beta, w2, b2, *, tm_rows=2048,
                  matmul_dtype=None):
    """x_bhwc: (B, H, W, A).  Returns (B, Bd, H, W), matching the PyTorch module.

    w1: (A, A), b1: (A,)     -- lin1 (weight stored as (in, out))
    gamma, beta: (A,)        -- LayerNorm affine
    w2: (A, Bd), b2: (Bd,)   -- lin2 (weight stored as (in, out))
    """
    B, H, W, A = x_bhwc.shape
    Bd = w2.shape[1]
    HW = H * W
    out_dtype = x_bhwc.dtype

    # ---- channel-packing factor: P logical rows per lane super-row --------
    P = 1
    for p in (8, 4, 2):
        if HW % p == 0 and p * A <= 256:
            P = p
            break
    PW = P * A        # packed lane width
    NS = HW // P      # number of super-rows

    # ---- fold LN affine into lin2, build packed block-diagonal weights ----
    eye_p = jnp.eye(P, dtype=jnp.float32)
    w1_bd = jnp.kron(eye_p, w1.astype(jnp.float32))                    # (PW, PW)
    b1p = jnp.tile(b1.astype(jnp.float32), P).reshape(1, PW)
    seg = jnp.kron(eye_p, jnp.full((A, A), 1.0 / A, jnp.float32))      # (PW, PW)
    w2f = (gamma[:, None] * w2).astype(jnp.float32)                    # gamma folded
    w2p = jnp.kron(eye_p, w2f)                                         # (PW, P*Bd)
    b2f = (beta @ w2 + b2).astype(jnp.float32)                         # beta folded
    b2p = jnp.tile(b2f, P).reshape(1, P * Bd)

    if matmul_dtype is not None:
        # Only the tiny constant weights are cast here; x is cast in-kernel and
        # the LN-statistics matrix / biases stay f32.
        w1_bd = w1_bd.astype(matmul_dtype)
        w2p = w2p.astype(matmul_dtype)

    xp = x_bhwc.reshape(B, NS, PW)  # free row-major reshape (packing)

    # ---- tiling --------------------------------------------------------------
    cap = max(8, (max(tm_rows, P) // P // 8) * 8)       # super-rows per tile cap
    min_row_tiles = 2 if B == 1 else 1                   # keep both v7x TCs busy
    tms, NS_p = _pick_row_tile(NS, cap, min_row_tiles)
    if NS_p != NS:
        xp = jnp.pad(xp, ((0, 0), (0, NS_p - NS), (0, 0)))

    grid = (B, NS_p // tms)
    kern = functools.partial(todist_kernel, compute_dtype=matmul_dtype)

    out_p = pl.pallas_call(
        kern,
        out_shape=jax.ShapeDtypeStruct((B, NS_p, P * Bd), out_dtype),
        grid_spec=pltpu.PrefetchScalarGridSpec(
            num_scalar_prefetch=0,
            grid=grid,
            in_specs=[
                pl.BlockSpec((1, tms, PW), lambda b, t: (b, t, 0)),   # packed x rows
                pl.BlockSpec((PW, PW), lambda b, t: (0, 0)),          # block-diag W1
                pl.BlockSpec((1, PW), lambda b, t: (0, 0)),           # packed b1
                pl.BlockSpec((PW, PW), lambda b, t: (0, 0)),          # segmented-mean matrix
                pl.BlockSpec((PW, P * Bd), lambda b, t: (0, 0)),      # block-diag W2 (gamma folded)
                pl.BlockSpec((1, P * Bd), lambda b, t: (0, 0)),       # packed b2 (beta folded)
            ],
            out_specs=pl.BlockSpec((1, tms, P * Bd), lambda b, t: (b, t, 0)),
        ),
        compiler_params=pltpu.CompilerParams(
            dimension_semantics=("parallel", "parallel"),
        ),
    )(xp, w1_bd, b1p, seg, w2p, b2p)

    if NS_p != NS:
        out_p = out_p[:, :NS, :]
    # (B, NS, P*Bd) is row-major (B, H, W, Bd) after a free reshape; the final
    # BHWC->BCHW permute (the module's own last op) runs on the smallest tensor.
    return out_p.reshape(B, H, W, Bd).transpose(0, 3, 1, 2)


def _linear_init(key, fan_in, fan_out, dtype=jnp.float32):
    """Deterministic init mimicking torch.nn.Linear's U(-1/sqrt(fan_in), ...)."""
    kw, kb = jax.random.split(key)
    bound = 1.0 / jnp.sqrt(jnp.array(fan_in, dtype))
    # stored already transposed: (in, out), i.e. PyTorch weight.T
    w = jax.random.uniform(kw, (fan_in, fan_out), dtype, -bound, bound)
    b = jax.random.uniform(kb, (fan_out,), dtype, -bound, bound)
    return w, b


def _reference(x_bhwc, w1, b1, gamma, beta, w2, b2):
    h = x_bhwc @ w1 + b1
    mu = jnp.mean(h, axis=-1, keepdims=True)
    var = jnp.mean((h - mu) ** 2, axis=-1, keepdims=True)
    hn = (h - mu) / jnp.sqrt(var + LN_EPS) * gamma + beta
    y = hn @ w2 + b2
    return y.transpose(0, 3, 1, 2)


if __name__ == "__main__":
    key = jax.random.PRNGKey(0)
    k_x, k_l1, k_l2, k_g, k_b = jax.random.split(key, 5)

    B, Hs, Ws = 2, 16, 16
    adim, bdim = 32, 16

    x = jax.random.normal(k_x, (B, Hs, Ws, adim), jnp.float32)

    w1, b1 = _linear_init(k_l1, adim, adim)                 # lin1: adim -> adim
    gamma = 1.0 + 0.1 * jax.random.normal(k_g, (adim,), jnp.float32)
    beta = 0.05 * jax.random.normal(k_b, (adim,), jnp.float32)
    w2, b2 = _linear_init(k_l2, adim, bdim)                 # lin2: adim -> bdim

    ref = _reference(x, w1, b1, gamma, beta, w2, b2)

    # f32 path (tight check).
    out = todist_pallas(x, w1, b1, gamma, beta, w2, b2)
    out = jax.block_until_ready(out)
    assert out.shape == (B, bdim, Hs, Ws)
    assert jnp.allclose(out, ref, atol=1e-4, rtol=1e-4)

    # bf16 matmul-operand path (f32 LN / bias / accumulation): loose sanity check.
    out_bf16 = todist_pallas(x, w1, b1, gamma, beta, w2, b2,
                             matmul_dtype=jnp.bfloat16)
    out_bf16 = jax.block_until_ready(out_bf16)
    assert out_bf16.shape == (B, bdim, Hs, Ws)
    assert bool(jnp.all(jnp.isfinite(out_bf16)))
    assert jnp.allclose(out_bf16, ref, atol=0.3, rtol=0.1)

    print("KERNEL_OK")
</pallas_src>

<mosaic_0001>
module attributes {stable_mosaic.version = 11 : i64} {
  func.func @todist_kernel(%arg0: i32, %arg1: i32, %arg2: memref<1x32x256xf32, #tpu.memory_space<vmem>>, %arg3: memref<256x256xf32, #tpu.memory_space<vmem>>, %arg4: memref<1x256xf32, #tpu.memory_space<vmem>>, %arg5: memref<256x256xf32, #tpu.memory_space<vmem>>, %arg6: memref<256x128xf32, #tpu.memory_space<vmem>>, %arg7: memref<1x128xf32, #tpu.memory_space<vmem>>, %arg8: memref<1x32x128xf32, #tpu.memory_space<vmem>>) attributes {dimension_semantics = [#tpu.dimension_semantics<parallel>, #tpu.dimension_semantics<parallel>], iteration_bounds = array<i64: 2, 1>, scalar_prefetch = 0 : i64, scratch_operands = 0 : i64, tpu.core_type = #tpu.core_type<tc>, window_params = [{transform_indices = @transform_0, window_bounds = array<i64: 1, 32, 256>}, {pipeline_mode = #tpu.pipeline_mode<synchronous>, transform_indices = @transform_1, window_bounds = array<i64: 256, 256>}, {pipeline_mode = #tpu.pipeline_mode<synchronous>, transform_indices = @transform_2, window_bounds = array<i64: 1, 256>}, {pipeline_mode = #tpu.pipeline_mode<synchronous>, transform_indices = @transform_3, window_bounds = array<i64: 256, 256>}, {pipeline_mode = #tpu.pipeline_mode<synchronous>, transform_indices = @transform_4, window_bounds = array<i64: 256, 128>}, {pipeline_mode = #tpu.pipeline_mode<synchronous>, transform_indices = @transform_5, window_bounds = array<i64: 1, 128>}, {transform_indices = @transform_6, window_bounds = array<i64: 1, 32, 128>}]} {
    %c0 = arith.constant 0 : index
    %c0_0 = arith.constant 0 : index
    %c0_1 = arith.constant 0 : index
    %0 = vector.load %arg2[%c0, %c0_0, %c0_1] : memref<1x32x256xf32, #tpu.memory_space<vmem>>, vector<1x32x256xf32>
    %1 = vector.shape_cast %0 : vector<1x32x256xf32> to vector<32x256xf32>
    %c0_2 = arith.constant 0 : index
    %c0_3 = arith.constant 0 : index
    %2 = vector.load %arg3[%c0_2, %c0_3] : memref<256x256xf32, #tpu.memory_space<vmem>>, vector<256x256xf32>
    %cst = arith.constant dense<0.000000e+00> : vector<32x256xf32>
    %3 = tpu.matmul %1, %2, %cst {dimension_numbers = #tpu.dot_dimension_numbers<[1], [0], [0], [1], [0, 0, 1, 1], [], []>} : vector<32x256xf32>, vector<256x256xf32>, vector<32x256xf32> -> vector<32x256xf32>
    %c0_4 = arith.constant 0 : index
    %c0_5 = arith.constant 0 : index
    %4 = vector.load %arg4[%c0_4, %c0_5] : memref<1x256xf32, #tpu.memory_space<vmem>>, vector<1x256xf32>
    %5 = vector.broadcast %4 : vector<1x256xf32> to vector<32x256xf32>
    %6 = arith.addf %3, %5 : vector<32x256xf32>
    %c0_6 = arith.constant 0 : index
    %c0_7 = arith.constant 0 : index
    %7 = vector.load %arg5[%c0_6, %c0_7] : memref<256x256xf32, #tpu.memory_space<vmem>>, vector<256x256xf32>
    %cst_8 = arith.constant dense<0.000000e+00> : vector<32x256xf32>
    %8 = tpu.matmul %6, %7, %cst_8 {dimension_numbers = #tpu.dot_dimension_numbers<[1], [0], [0], [1], [0, 0, 1, 1], [], []>} : vector<32x256xf32>, vector<256x256xf32>, vector<32x256xf32> -> vector<32x256xf32>
    %9 = arith.mulf %6, %6 : vector<32x256xf32>
    %c0_9 = arith.constant 0 : index
    %c0_10 = arith.constant 0 : index
    %10 = vector.load %arg5[%c0_9, %c0_10] : memref<256x256xf32, #tpu.memory_space<vmem>>, vector<256x256xf32>
    %cst_11 = arith.constant dense<0.000000e+00> : vector<32x256xf32>
    %11 = tpu.matmul %9, %10, %cst_11 {dimension_numbers = #tpu.dot_dimension_numbers<[1], [0], [0], [1], [0, 0, 1, 1], [], []>} : vector<32x256xf32>, vector<256x256xf32>, vector<32x256xf32> -> vector<32x256xf32>
    %12 = arith.mulf %8, %8 : vector<32x256xf32>
    %13 = arith.subf %11, %12 : vector<32x256xf32>
    %14 = arith.subf %6, %8 : vector<32x256xf32>
    %cst_12 = arith.constant 9.99999974E-6 : f32
    %15 = vector.broadcast %cst_12 : f32 to vector<32x256xf32>
    %16 = arith.addf %13, %15 : vector<32x256xf32>
    %17 = math.rsqrt %16 : vector<32x256xf32>
    %18 = arith.mulf %14, %17 : vector<32x256xf32>
    %c0_13 = arith.constant 0 : index
    %c0_14 = arith.constant 0 : index
    %19 = vector.load %arg6[%c0_13, %c0_14] : memref<256x128xf32, #tpu.memory_space<vmem>>, vector<256x128xf32>
    %cst_15 = arith.constant dense<0.000000e+00> : vector<32x128xf32>
    %20 = tpu.matmul %18, %19, %cst_15 {dimension_numbers = #tpu.dot_dimension_numbers<[1], [0], [0], [1], [0, 0, 1, 1], [], []>} : vector<32x256xf32>, vector<256x128xf32>, vector<32x128xf32> -> vector<32x128xf32>
    %c0_16 = arith.constant 0 : index
    %c0_17 = arith.constant 0 : index
    %21 = vector.load %arg7[%c0_16, %c0_17] : memref<1x128xf32, #tpu.memory_space<vmem>>, vector<1x128xf32>
    %22 = vector.broadcast %21 : vector<1x128xf32> to vector<32x128xf32>
    %23 = arith.addf %20, %22 : vector<32x128xf32>
    %c0_18 = arith.constant 0 : index
    %c0_19 = arith.constant 0 : index
    %c0_20 = arith.constant 0 : index
    %24 = vector.load %arg8[%c0_18, %c0_19, %c0_20] : memref<1x32x128xf32, #tpu.memory_space<vmem>>, vector<1x32x128xf32>
    %25 = vector.shape_cast %24 : vector<1x32x128xf32> to vector<32x128xf32>
    %26 = vector.shape_cast %23 : vector<32x128xf32> to vector<1x32x128xf32>
    tpu.vector_store %arg8[%c0_18, %c0_19, %c0_20], %26 {strides = array<i32>} : memref<1x32x128xf32, #tpu.memory_space<vmem>>, vector<1x32x128xf32>,
    return
  }
  func.func @transform_0(%arg0: i32, %arg1: i32) -> (i32, i32, i32) {
    %c0_i32 = arith.constant 0 : i32
    %c0_i32_0 = arith.constant 0 : i32
    return %arg0, %arg1, %c0_i32 : i32, i32, i32
  }
  func.func @transform_1(%arg0: i32, %arg1: i32) -> (i32, i32) {
    %c0_i32 = arith.constant 0 : i32
    %c0_i32_0 = arith.constant 0 : i32
    %c0_i32_1 = arith.constant 0 : i32
    return %c0_i32, %c0_i32_0 : i32, i32
  }
  func.func @transform_2(%arg0: i32, %arg1: i32) -> (i32, i32) {
    %c0_i32 = arith.constant 0 : i32
    %c0_i32_0 = arith.constant 0 : i32
    %c0_i32_1 = arith.constant 0 : i32
    return %c0_i32, %c0_i32_0 : i32, i32
  }
  func.func @transform_3(%arg0: i32, %arg1: i32) -> (i32, i32) {
    %c0_i32 = arith.constant 0 : i32
    %c0_i32_0 = arith.constant 0 : i32
    %c0_i32_1 = arith.constant 0 : i32
    return %c0_i32, %c0_i32_0 : i32, i32
  }
  func.func @transform_4(%arg0: i32, %arg1: i32) -> (i32, i32) {
    %c0_i32 = arith.constant 0 : i32
    %c0_i32_0 = arith.constant 0 : i32
    %c0_i32_1 = arith.constant 0 : i32
    return %c0_i32, %c0_i32_0 : i32, i32
  }
  func.func @transform_5(%arg0: i32, %arg1: i32) -> (i32, i32) {
    %c0_i32 = arith.constant 0 : i32
    %c0_i32_0 = arith.constant 0 : i32
    %c0_i32_1 = arith.constant 0 : i32
    return %c0_i32, %c0_i32_0 : i32, i32
  }
  func.func @transform_6(%arg0: i32, %arg1: i32) -> (i32, i32, i32) {
    %c0_i32 = arith.constant 0 : i32
    %c0_i32_0 = arith.constant 0 : i32
    return %arg0, %arg1, %c0_i32 : i32, i32, i32
  }
}

</mosaic_0001>

<llo_original>
// kernel: tpu_custom_call.1
$region0: #{tpu_custom_call.1}
  #allocation0 [shape = 'u32[]', space=smem, size = 0x4, offset = 0x4, fixed_abs, tag = 'smem constant byte address 0x4 - core index']
  #allocation1 [shape = 'u32[144,128]{1,0:T(1,128)}', space=vmem, size = 0x12000, scoped, tag = 'internal scratch']
  %s0 = inlined_call_operand.hbm [shape: f32[2,32,256], index: 0, kind: input, shape index: {}]
  %s1 = inlined_call_operand.hbm [shape: f32[256,256], index: 1, kind: input, shape index: {}]
  %s2 = inlined_call_operand.vmem [shape: f32[1,256], index: 2, kind: input, shape index: {}]
  %s3 = inlined_call_operand.hbm [shape: f32[256,256], index: 3, kind: input, shape index: {}]
  %s4 = inlined_call_operand.hbm [shape: f32[256,128], index: 4, kind: input, shape index: {}]
  %s5 = inlined_call_operand.vmem [shape: f32[1,128], index: 5, kind: input, shape index: {}]
  %s6 = inlined_call_operand.hbm [shape: f32[2,32,128], index: 6, kind: output, shape index: {}]
  %s7 = sld [smem:[#allocation0]]
  $region73: #{tpu_custom_call.1} parent=0
    _
  %s9 = ssub.s32 1, %s7
  %s10 = scalar_select 0, %s9, %s7
  $region1: #{tpu_custom_call.1} parent=0
    #allocation2 [shape = 'u8[65536]{0}', space=vmem, size = 0x10000, scoped, tag = 'input window, operand 0']
    #allocation3 [shape = 's32[2]{0}', space=sflag, size = 0x8, scoped, tag = 'scoped memory for tpu_custom_call.1']
    #allocation4 [shape = 's32[2]{0}', space=sflag, size = 0x8, scoped, tag = 'scoped memory for tpu_custom_call.1']
    #allocation5 [shape = 'u8[262144]{0}', space=vmem, size = 0x40000, scoped, tag = 'input window, operand 1, single buffered']
    #allocation6 [shape = 's32[1]{0}', space=sflag, size = 0x4, scoped, tag = 'scoped memory for tpu_custom_call.1']
    #allocation7 [shape = 'u8[262144]{0}', space=vmem, size = 0x40000, scoped, tag = 'input window, operand 3, single buffered']
    #allocation8 [shape = 'u8[131072]{0}', space=vmem, size = 0x20000, scoped, tag = 'input window, operand 4, single buffered']
    #allocation9 [shape = 's32[1]{0}', space=sflag, size = 0x4, scoped, tag = 'scoped memory for tpu_custom_call.1']
    #allocation10 [shape = 'u8[32768]{0}', space=vmem, size = 0x8000, scoped, tag = 'output window, operand 0']
    %11 = vsyncpa [#allocation3], 0
    %s12 = scalar_lea.sflag [#allocation3], 1
    %13 = vsyncpa %s12, 0
    %14 = vsyncpa [#allocation6], 0
    %15 = vsyncpa [#allocation9], 0
    %16 = vsyncpa [#allocation4], 0
    %s17 = scalar_lea.sflag [#allocation4], 1
    %18 = vsyncpa %s17, 0
    loop: start=0, step=1, limit=4
    $region2: #{tpu_custom_call.1} parent=1 // loop_pre_header
      _
    $region3: #{tpu_custom_call.1} parent=1 // loop_header
      %s20 = sphi 0, %s24
      %p21 = scmp.ge.s32.totalorder %s20, 4
      %s27 = sphi 0, %s39
      %s28 = sphi 0, %s35
      %s29 = sphi 0, %s27
      %s30 = sphi 0, %s28
      %s31 = sphi 0, %s29
      %s32 = sphi 0, %s30
      %s44 = sphi 0, %s46
      %s47 = sphi 0, %s44
      %s48 = sphi 0, %s47
      %s64 = sphi 0, %s48
      %s68 = sphi 0, %s68
      %s70 = sphi 0, %s68
      %s71 = sphi 0, %s70
      %s85 = sphi 0, %s71
      %s89 = sphi 0, %s89
      %s91 = sphi 0, %s89
      %s92 = sphi 0, %s91
      %s106 = sphi 0, %s92
      %s110 = sphi 0, %s110
      %s112 = sphi 0, %s110
      %s113 = sphi 0, %s112
      %s127 = sphi 0, %s113
      %s131 = sphi 0, %s131
      %s133 = sphi 0, %s131
      %s134 = sphi 0, %s133
      %s148 = sphi 0, %s134
      %s152 = sphi 0, %s152
      %s154 = sphi 0, %s152
      %s155 = sphi 0, %s154
      %s169 = sphi 0, %s155
      %s177 = sphi 0, %s179
      %s180 = sphi 0, %s177
      %s181 = sphi 0, %s180
      %s197 = sphi 0, %s181
    $region4: #{tpu_custom_call.1} parent=1 // loop_header_branch
      %23 = sbr.rel (%p21) target = $region8
    $region5: #{tpu_custom_call.1} parent=1 // loop_body
      %s25 = ssub.s32 %s20, 1
      %s26 = ssub.s32 %s20, 2
      %s33 = sadd.s32 1, %s28
      %p34 = scmp.ge.s32.totalorder %s33, 1
      %s35 = scalar_select %p34, 0, %s33
      %s36 = sadd.s32 1, %s27
      %s37 = scalar_select %p34, %s36, %s27
      %p38 = scmp.ge.s32.totalorder %s37, 2
      %s39 = scalar_select %p38, 0, %s37
      %s40 = ssub.s32 %s27, %s39
      %s41 = ssub.s32 %s28, %s35
      %s42 = sor.u32 %s40, %s41
      %p43 = scmp.eq.s32.totalorder %s42, 0
      %s45 = sadd.s32 %s44, 1
      %s46 = scalar_select %p43, %s44, %s45
      %p49 = pneg %p43
      %p50 = scmp.eq.s32.totalorder %s20, 1
      %p51 = por %p49, %p50
      %p52 = scmp.ne.s32.totalorder %s44, %s47
      %p53 = scmp.eq.s32.totalorder %s20, 0
      %p54 = por %p52, %p53
      %p55 = scmp.ne.s32.totalorder %s44, %s47
      %p56 = scmp.eq.s32.totalorder %s25, 1
      %p57 = por %p55, %p56
      %p58 = scmp.ne.s32.totalorder %s47, %s48
      %p59 = scmp.eq.s32.totalorder %s25, 0
      %p60 = por %p58, %p59
      %p61 = scmp.ne.s32.totalorder %s47, %s48
      %p62 = scmp.eq.s32.totalorder %s26, 1
      %p63 = por %p61, %p62
      %p65 = scmp.ne.s32.totalorder %s48, %s64
      %p66 = scmp.eq.s32.totalorder %s26, 0
      %p67 = por %p65, %p66
      %s69 = sadd.s32 %s68, 1
      %p72 = scmp.eq.s32.totalorder %s20, 1
      %p73 = scmp.ne.s32.totalorder %s68, %s70
      %p74 = scmp.eq.s32.totalorder %s20, 0
      %p75 = por %p73, %p74
      %p76 = scmp.ne.s32.totalorder %s68, %s70
      %p77 = scmp.eq.s32.totalorder %s25, 1
      %p78 = por %p76, %p77
      %p79 = scmp.ne.s32.totalorder %s70, %s71
      %p80 = scmp.eq.s32.totalorder %s25, 0
      %p81 = por %p79, %p80
      %p82 = scmp.ne.s32.totalorder %s70, %s71
      %p83 = scmp.eq.s32.totalorder %s26, 1
      %p84 = por %p82, %p83
      %p86 = scmp.ne.s32.totalorder %s71, %s85
      %p87 = scmp.eq.s32.totalorder %s26, 0
      %p88 = por %p86, %p87
      %s90 = sadd.s32 %s89, 1
      %p93 = scmp.eq.s32.totalorder %s20, 1
      %p94 = scmp.ne.s32.totalorder %s89, %s91
      %p95 = scmp.eq.s32.totalorder %s20, 0
      %p96 = por %p94, %p95
      %p97 = scmp.ne.s32.totalorder %s89, %s91
      %p98 = scmp.eq.s32.totalorder %s25, 1
      %p99 = por %p97, %p98
      %p100 = scmp.ne.s32.totalorder %s91, %s92
      %p101 = scmp.eq.s32.totalorder %s25, 0
      %p102 = por %p100, %p101
      %p103 = scmp.ne.s32.totalorder %s91, %s92
      %p104 = scmp.eq.s32.totalorder %s26, 1
      %p105 = por %p103, %p104
      %p107 = scmp.ne.s32.totalorder %s92, %s106
      %p108 = scmp.eq.s32.totalorder %s26, 0
      %p109 = por %p107, %p108
      %s111 = sadd.s32 %s110, 1
      %p114 = scmp.eq.s32.totalorder %s20, 1
      %p115 = scmp.ne.s32.totalorder %s110, %s112
      %p116 = scmp.eq.s32.totalorder %s20, 0
      %p117 = por %p115, %p116
      %p118 = scmp.ne.s32.totalorder %s110, %s112
      %p119 = scmp.eq.s32.totalorder %s25, 1
      %p120 = por %p118, %p119
      %p121 = scmp.ne.s32.totalorder %s112, %s113
      %p122 = scmp.eq.s32.totalorder %s25, 0
      %p123 = por %p121, %p122
      %p124 = scmp.ne.s32.totalorder %s112, %s113
      %p125 = scmp.eq.s32.totalorder %s26, 1
      %p126 = por %p124, %p125
      %p128 = scmp.ne.s32.totalorder %s113, %s127
      %p129 = scmp.eq.s32.totalorder %s26, 0
      %p130 = por %p128, %p129
      %s132 = sadd.s32 %s131, 1
      %p135 = scmp.eq.s32.totalorder %s20, 1
      %p136 = scmp.ne.s32.totalorder %s131, %s133
      %p137 = scmp.eq.s32.totalorder %s20, 0
      %p138 = por %p136, %p137
      %p139 = scmp.ne.s32.totalorder %s131, %s133
      %p140 = scmp.eq.s32.totalorder %s25, 1
      %p141 = por %p139, %p140
      %p142 = scmp.ne.s32.totalorder %s133, %s134
      %p143 = scmp.eq.s32.totalorder %s25, 0
      %p144 = por %p142, %p143
      %p145 = scmp.ne.s32.totalorder %s133, %s134
      %p146 = scmp.eq.s32.totalorder %s26, 1
      %p147 = por %p145, %p146
      %p149 = scmp.ne.s32.totalorder %s134, %s148
      %p150 = scmp.eq.s32.totalorder %s26, 0
      %p151 = por %p149, %p150
      %s153 = sadd.s32 %s152, 1
      %p156 = scmp.eq.s32.totalorder %s20, 1
      %p157 = scmp.ne.s32.totalorder %s152, %s154
      %p158 = scmp.eq.s32.totalorder %s20, 0
      %p159 = por %p157, %p158
      %p160 = scmp.ne.s32.totalorder %s152, %s154
      %p161 = scmp.eq.s32.totalorder %s25, 1
      %p162 = por %p160, %p161
      %p163 = scmp.ne.s32.totalorder %s154, %s155
      %p164 = scmp.eq.s32.totalorder %s25, 0
      %p165 = por %p163, %p164
      %p166 = scmp.ne.s32.totalorder %s154, %s155
      %p167 = scmp.eq.s32.totalorder %s26, 1
      %p168 = por %p166, %p167
      %p170 = scmp.ne.s32.totalorder %s155, %s169
      %p171 = scmp.eq.s32.totalorder %s26, 0
      %p172 = por %p170, %p171
      %s173 = ssub.s32 %s27, %s39
      %s174 = ssub.s32 %s28, %s35
      %s175 = sor.u32 %s173, %s174
      %p176 = scmp.eq.s32.totalorder %s175, 0
      %s178 = sadd.s32 %s177, 1
      %s179 = scalar_select %p176, %s177, %s178
      %p182 = pneg %p176
      %p183 = scmp.eq.s32.totalorder %s20, 1
      %p184 = por %p182, %p183
      %p185 = scmp.ne.s32.totalorder %s177, %s180
      %p186 = scmp.eq.s32.totalorder %s20, 0
      %p187 = por %p185, %p186
      %p188 = scmp.ne.s32.totalorder %s177, %s180
      %p189 = scmp.eq.s32.totalorder %s25, 1
      %p190 = por %p188, %p189
      %p191 = scmp.ne.s32.totalorder %s180, %s181
      %p192 = scmp.eq.s32.totalorder %s25, 0
      %p193 = por %p191, %p192
      %p194 = scmp.ne.s32.totalorder %s180, %s181
      %p195 = scmp.eq.s32.totalorder %s26, 1
      %p196 = por %p194, %p195
      %p198 = scmp.ne.s32.totalorder %s181, %s197
      %p199 = scmp.eq.s32.totalorder %s26, 0
      %p200 = por %p198, %p199
      %p201 = scmp.le.s32.totalorder 1, %s20
      %p202 = scmp.lt.s32.totalorder %s20, 3
      %p203 = pnand %p201, %p202
      %p204 = pneg %p203
      // Predicated region
      $region9: #{tpu_custom_call.1} parent=5 // pred_check
        _
      $region10: #{tpu_custom_call.1} parent=5 // pred_check_branch
        %206 = sbr.rel (%p203) target = $region12
      $region11: #{tpu_custom_call.1} parent=5 // pred_region
        %s207 = ssub.s32 %s20, 1
        // Predicated region
        $region13: #{tpu_custom_call.1} parent=11 // pred_check
          %p208 = pneg %p81
        $region14: #{tpu_custom_call.1} parent=11 // pred_check_branch
          %210 = sbr.rel (%p208) target = $region16
        $region15: #{tpu_custom_call.1} parent=11 // pred_region
          %s212 = ssub.s32 8192, 8192
          %213 = vsyncadd [#allocation6], %s212
          %s214 = sshll.u32 [#allocation5], 4
          %s215 = int_to_ptr.vmem [resolvable:$true] %s214
          %220 = dma.hbm_to_vmem [thread:$0]  %s1, 8192, %s215, [#allocation6], 256, 256, 16
        $region16: #{tpu_custom_call.1} parent=11 // pred_fallthru
          _
        // Predicated region
        $region17: #{tpu_custom_call.1} parent=11 // pred_check
          %p221 = pneg %p102
        $region18: #{tpu_custom_call.1} parent=11 // pred_check_branch
          %223 = sbr.rel (%p221) target = $region20
        $region19: #{tpu_custom_call.1} parent=11 // pred_region
          _
        $region20: #{tpu_custom_call.1} parent=11 // pred_fallthru
          _
        // Predicated region
        $region21: #{tpu_custom_call.1} parent=11 // pred_check
          %p224 = pneg %p123
        $region22: #{tpu_custom_call.1} parent=11 // pred_check_branch
          %226 = sbr.rel (%p224) target = $region24
        $region23: #{tpu_custom_call.1} parent=11 // pred_region
          %s228 = ssub.s32 8192, 8192
          %229 = vsyncadd [#allocation6], %s228
          %s230 = sshll.u32 [#allocation7], 4
          %s231 = int_to_ptr.vmem [resolvable:$true] %s230
          %236 = dma.hbm_to_vmem [thread:$0]  %s3, 8192, %s231, [#allocation6], 256, 256, 16
        $region24: #{tpu_custom_call.1} parent=11 // pred_fallthru
          _
        // Predicated region
        $region25: #{tpu_custom_call.1} parent=11 // pred_check
          %p237 = pneg %p144
        $region26: #{tpu_custom_call.1} parent=11 // pred_check_branch
          %239 = sbr.rel (%p237) target = $region28
        $region27: #{tpu_custom_call.1} parent=11 // pred_region
          %s241 = ssub.s32 4096, 4096
          %242 = vsyncadd [#allocation9], %s241
          %s243 = sshll.u32 [#allocation8], 4
          %s244 = int_to_ptr.vmem [resolvable:$true] %s243
          %249 = dma.hbm_to_vmem [thread:$0]  %s4, 4096, %s244, [#allocation9], 128, 128, 8
        $region28: #{tpu_custom_call.1} parent=11 // pred_fallthru
          _
        // Predicated region
        $region29: #{tpu_custom_call.1} parent=11 // pred_check
          %p250 = pneg %p165
        $region30: #{tpu_custom_call.1} parent=11 // pred_check_branch
          %252 = sbr.rel (%p250) target = $region32
        $region31: #{tpu_custom_call.1} parent=11 // pred_region
          _
        $region32: #{tpu_custom_call.1} parent=11 // pred_fallthru
          _
      $region12: #{tpu_custom_call.1} parent=5 // pred_fallthru
        _
      %p253 = scmp.lt.s32.totalorder %s20, 2
      // Predicated region
      $region33: #{tpu_custom_call.1} parent=5 // pred_check
        %p254 = pneg %p253
      $region34: #{tpu_custom_call.1} parent=5 // pred_check_branch
        %256 = sbr.rel (%p254) target = $region36
      $region35: #{tpu_custom_call.1} parent=5 // pred_region
        // Predicated region
        $region37: #{tpu_custom_call.1} parent=35 // pred_check
          %p257 = pneg %p54
        $region38: #{tpu_custom_call.1} parent=35 // pred_check_branch
          %259 = sbr.rel (%p257) target = $region40
        $region39: #{tpu_custom_call.1} parent=35 // pred_region
          %s260 = sand.u32 %s44, 1
          %s261 = scalar_lea.sflag [#allocation3], %s260
          %s262 = sand.u32 %s44, 1
          %s263 = smul.addr %s262, 64
          %s264 = scalar_lea.vmem [#allocation2], %s263
          %s265 = smul.u32 4, %s28
          %s267 = ssub.s32 1024, 1024
          %268 = vsyncadd %s261, %s267
          %s269 = smul.addr %s265, 2
          %s270 = smul.addr %s27, 8
          %s271 = sadd.s32 %s269, %s270
          %s272 = smul.addr %s271, 128
          %s273 = scalar_lea.hbm %s0, %s272
          %s274 = sshll.u32 %s264, 4
          %s275 = int_to_ptr.vmem [resolvable:$true] %s274
          %280 = dma.hbm_to_vmem [thread:$0]  %s273, 1024, %s275, %s261, 256, 256, 16
        $region40: #{tpu_custom_call.1} parent=35 // pred_fallthru
          _
      $region36: #{tpu_custom_call.1} parent=5 // pred_fallthru
        _
      %p281 = scmp.le.s32.totalorder 1, %s20
      %p282 = scmp.lt.s32.totalorder %s20, 3
      %p283 = pnand %p281, %p282
      %p284 = pneg %p283
      // Predicated region
      $region41: #{tpu_custom_call.1} parent=5 // pred_check
        _
      $region42: #{tpu_custom_call.1} parent=5 // pred_check_branch
        %286 = sbr.rel (%p283) target = $region44
      $region43: #{tpu_custom_call.1} parent=5 // pred_region
        %s287 = ssub.s32 %s20, 1
        %s288 = sand.u32 %s47, 1
        %s289 = scalar_lea.sflag [#allocation3], %s288
        %s290 = sand.u32 %s47, 1
        %s291 = smul.addr %s290, 64
        %s292 = scalar_lea.vmem [#allocation2], %s291
        // Predicated region
        $region45: #{tpu_custom_call.1} parent=43 // pred_check
          %p293 = pneg %p60
        $region46: #{tpu_custom_call.1} parent=43 // pred_check_branch
          %295 = sbr.rel (%p293) target = $region48
        $region47: #{tpu_custom_call.1} parent=43 // pred_region
          %296 = dma.done %s289, 1024
        $region48: #{tpu_custom_call.1} parent=43 // pred_fallthru
          _
        // Predicated region
        $region49: #{tpu_custom_call.1} parent=43 // pred_check
          %p297 = pneg %p81
        $region50: #{tpu_custom_call.1} parent=43 // pred_check_branch
          %299 = sbr.rel (%p297) target = $region52
        $region51: #{tpu_custom_call.1} parent=43 // pred_region
          %300 = dma.done [#allocation6], 8192
        $region52: #{tpu_custom_call.1} parent=43 // pred_fallthru
          _
        // Predicated region
        $region53: #{tpu_custom_call.1} parent=43 // pred_check
          %p301 = pneg %p123
        $region54: #{tpu_custom_call.1} parent=43 // pred_check_branch
          %303 = sbr.rel (%p301) target = $region56
        $region55: #{tpu_custom_call.1} parent=43 // pred_region
          %304 = dma.done [#allocation6], 8192
        $region56: #{tpu_custom_call.1} parent=43 // pred_fallthru
          _
        // Predicated region
        $region57: #{tpu_custom_call.1} parent=43 // pred_check
          %p305 = pneg %p144
        $region58: #{tpu_custom_call.1} parent=43 // pred_check_branch
          %307 = sbr.rel (%p305) target = $region60
        $region59: #{tpu_custom_call.1} parent=43 // pred_region
          %308 = dma.done [#allocation9], 4096
        $region60: #{tpu_custom_call.1} parent=43 // pred_fallthru
          _
        %s309 = sand.u32 %s47, 1
        %s310 = scalar_lea.sflag [#allocation3], %s309
        %s311 = sand.u32 %s47, 1
        %s312 = smul.addr %s311, 64
        %s313 = scalar_lea.vmem [#allocation2], %s312
        %p314 = pneg %p60
        %p315 = pneg %p57
        %p316 = pneg %p81
        %p317 = pneg %p78
        %p318 = pneg %p102
        %p319 = pneg %p99
        %p320 = pneg %p123
        %p321 = pneg %p120
        %p322 = pneg %p144
        %p323 = pneg %p141
        %p324 = pneg %p165
        %p325 = pneg %p162
        %p326 = pneg %p193
        %p327 = pneg %p190
        %s328 = sand.u32 %s180, 1
        %s329 = scalar_lea.sflag [#allocation4], %s328
        %s330 = sand.u32 %s180, 1
        %s331 = smul.addr %s330, 32
        %s332 = scalar_lea.vmem [#allocation10], %s331
        %s333 = smul.u32 4, %s30
        %s334 = smul.u32 4, %s30
        %v335 = vld [vmem:[%s292] sm:$0xff]
        %v336 = vld [vmem:[%s292 + $0x8] sm:$0xff]
        %v337 = vld [vmem:[%s292 + $0x10] sm:$0xff]
        %v338 = vld [vmem:[%s292 + $0x18] sm:$0xff]
        %v339 = vld [vmem:[%s292 + $0x20] sm:$0xff]
        %v340 = vld [vmem:[%s292 + $0x28] sm:$0xff]
        %v341 = vld [vmem:[%s292 + $0x30] sm:$0xff]
        %v342 = vld [vmem:[%s292 + $0x38] sm:$0xff]
        %v343 = vld [vmem:[#allocation5] sm:$0xff]
        %v344 = vld [vmem:[#allocation5 + $0x8] sm:$0xff]
        %v345 = vld [vmem:[#allocation5 + $0x10] sm:$0xff]
        %v346 = vld [vmem:[#allocation5 + $0x18] sm:$0xff]
        %v347 = vld [vmem:[#allocation5 + $0x20] sm:$0xff]
        %v348 = vld [vmem:[#allocation5 + $0x28] sm:$0xff]
        %v349 = vld [vmem:[#allocation5 + $0x30] sm:$0xff]
        %v350 = vld [vmem:[#allocation5 + $0x38] sm:$0xff]
        %v351 = vld [vmem:[#allocation5 + $0x40] sm:$0xff]
        %v352 = vld [vmem:[#allocation5 + $0x48] sm:$0xff]
        %v353 = vld [vmem:[#allocation5 + $0x50] sm:$0xff]
        %v354 = vld [vmem:[#allocation5 + $0x58] sm:$0xff]
        %v355 = vld [vmem:[#allocation5 + $0x60] sm:$0xff]
        %v356 = vld [vmem:[#allocation5 + $0x68] sm:$0xff]
        %v357 = vld [vmem:[#allocation5 + $0x70] sm:$0xff]
        %v358 = vld [vmem:[#allocation5 + $0x78] sm:$0xff]
        %v359 = vld [vmem:[#allocation5 + $0x80] sm:$0xff]
        %v360 = vld [vmem:[#allocation5 + $0x88] sm:$0xff]
        %v361 = vld [vmem:[#allocation5 + $0x90] sm:$0xff]
        %v362 = vld [vmem:[#allocation5 + $0x98] sm:$0xff]
        %v363 = vld [vmem:[#allocation5 + $0xa0] sm:$0xff]
        %v364 = vld [vmem:[#allocation5 + $0xa8] sm:$0xff]
        %v365 = vld [vmem:[#allocation5 + $0xb0] sm:$0xff]
        %v366 = vld [vmem:[#allocation5 + $0xb8] sm:$0xff]
        %v367 = vld [vmem:[#allocation5 + $0xc0] sm:$0xff]
        %v368 = vld [vmem:[#allocation5 + $0xc8] sm:$0xff]
        %v369 = vld [vmem:[#allocation5 + $0xd0] sm:$0xff]
        %v370 = vld [vmem:[#allocation5 + $0xd8] sm:$0xff]
        %v371 = vld [vmem:[#allocation5 + $0xe0] sm:$0xff]
        %v372 = vld [vmem:[#allocation5 + $0xe8] sm:$0xff]
        %v373 = vld [vmem:[#allocation5 + $0xf0] sm:$0xff]
        %v374 = vld [vmem:[#allocation5 + $0xf8] sm:$0xff]
        %v375 = vld [vmem:[#allocation5 + $0x100] sm:$0xff]
        %v376 = vld [vmem:[#allocation5 + $0x108] sm:$0xff]
        %v377 = vld [vmem:[#allocation5 + $0x110] sm:$0xff]
        %v378 = vld [vmem:[#allocation5 + $0x118] sm:$0xff]
        %v379 = vld [vmem:[#allocation5 + $0x120] sm:$0xff]
        %v380 = vld [vmem:[#allocation5 + $0x128] sm:$0xff]
        %v381 = vld [vmem:[#allocation5 + $0x130] sm:$0xff]
        %v382 = vld [vmem:[#allocation5 + $0x138] sm:$0xff]
        %v383 = vld [vmem:[#allocation5 + $0x140] sm:$0xff]
        %v384 = vld [vmem:[#allocation5 + $0x148] sm:$0xff]
        %v385 = vld [vmem:[#allocation5 + $0x150] sm:$0xff]
        %v386 = vld [vmem:[#allocation5 + $0x158] sm:$0xff]
        %v387 = vld [vmem:[#allocation5 + $0x160] sm:$0xff]
        %v388 = vld [vmem:[#allocation5 + $0x168] sm:$0xff]
        %v389 = vld [vmem:[#allocation5 + $0x170] sm:$0xff]
        %v390 = vld [vmem:[#allocation5 + $0x178] sm:$0xff]
        %v391 = vld [vmem:[#allocation5 + $0x180] sm:$0xff]
        %v392 = vld [vmem:[#allocation5 + $0x188] sm:$0xff]
        %v393 = vld [vmem:[#allocation5 + $0x190] sm:$0xff]
        %v394 = vld [vmem:[#allocation5 + $0x198] sm:$0xff]
        %v395 = vld [vmem:[#allocation5 + $0x1a0] sm:$0xff]
        %v396 = vld [vmem:[#allocation5 + $0x1a8] sm:$0xff]
        %v397 = vld [vmem:[#allocation5 + $0x1b0] sm:$0xff]
        %v398 = vld [vmem:[#allocation5 + $0x1b8] sm:$0xff]
        %v399 = vld [vmem:[#allocation5 + $0x1c0] sm:$0xff]
        %v400 = vld [vmem:[#allocation5 + $0x1c8] sm:$0xff]
        %v401 = vld [vmem:[#allocation5 + $0x1d0] sm:$0xff]
        %v402 = vld [vmem:[#allocation5 + $0x1d8] sm:$0xff]
        %v403 = vld [vmem:[#allocation5 + $0x1e0] sm:$0xff]
        %v404 = vld [vmem:[#allocation5 + $0x1e8] sm:$0xff]
        %v405 = vld [vmem:[#allocation5 + $0x1f0] sm:$0xff]
        %v406 = vld [vmem:[#allocation5 + $0x1f8] sm:$0xff]
        %v407 = vld [vmem:[%s2] sm:$0x3]
        %v409 = vlaneseq
        %v410 = vshrl.u32 %v409, 7
        %v411 = vsub.s32 0, %v410
        %v412 = vrot.slane %v407, %v411
        %v413 = vlaneseq
        %v414 = vshrl.u32 %v413, 7
        %v415 = vsub.s32 1, %v414
        %v416 = vrot.slane %v407, %v415
        %419 = vmatprep.subr.mxu0 %v344
        %420 = vmatpush1.msra.mxu0 %v343
        %421 = vmatprep.subr.mxu0 %v346
        %422 = vmatpush1.msra.mxu0 %v345
        %423 = vmatprep.subr.mxu0 %v348
        %424 = vmatpush1.msra.mxu0 %v347
        %425 = vmatprep.subr.mxu0 %v350
        %426 = vmatpush1.msra.mxu0 %v349
        %427 = vmatprep.subr.mxu0 %v352
        %428 = vmatpush1.msra.mxu0 %v351
        %429 = vmatprep.subr.mxu0 %v354
        %430 = vmatpush1.msra.mxu0 %v353
        %431 = vmatprep.subr.mxu0 %v356
        %432 = vmatpush1.msra.mxu0 %v355
        %433 = vmatprep.subr.mxu0 %v358
        %434 = vmatpush1.msra.mxu0 %v357
        %435 = vmatprep.subr.mxu0 %v360
        %436 = vmatpush1.msra.mxu0 %v359
        %437 = vmatprep.subr.mxu0 %v362
        %438 = vmatpush1.msra.mxu0 %v361
        %439 = vmatprep.subr.mxu0 %v364
        %440 = vmatpush1.msra.mxu0 %v363
        %441 = vmatprep.subr.mxu0 %v366
        %442 = vmatpush1.msra.mxu0 %v365
        %443 = vmatprep.subr.mxu0 %v368
        %444 = vmatpush1.msra.mxu0 %v367
        %445 = vmatprep.subr.mxu0 %v370
        %446 = vmatpush1.msra.mxu0 %v369
        %447 = vmatprep.subr.mxu0 %v372
        %448 = vmatpush1.msra.mxu0 %v371
        %449 = vmatprep.subr.mxu0 %v374
        %450 = vmatpush1.msra.mxu0 %v373
        %451 = vmatprep.subr.mxu0 %v376
        %452 = vmatpush1.msra.mxu0 %v375
        %453 = vmatprep.subr.mxu0 %v378
        %454 = vmatpush1.msra.mxu0 %v377
        %455 = vmatprep.subr.mxu0 %v380
        %456 = vmatpush1.msra.mxu0 %v379
        %457 = vmatprep.subr.mxu0 %v382
        %458 = vmatpush1.msra.mxu0 %v381
        %459 = vmatprep.subr.mxu0 %v384
        %460 = vmatpush1.msra.mxu0 %v383
        %461 = vmatprep.subr.mxu0 %v386
        %462 = vmatpush1.msra.mxu0 %v385
        %463 = vmatprep.subr.mxu0 %v388
        %464 = vmatpush1.msra.mxu0 %v387
        %465 = vmatprep.subr.mxu0 %v390
        %466 = vmatpush1.msra.mxu0 %v389
        %467 = vmatprep.subr.mxu0 %v392
        %468 = vmatpush1.msra.mxu0 %v391
        %469 = vmatprep.subr.mxu0 %v394
        %470 = vmatpush1.msra.mxu0 %v393
        %471 = vmatprep.subr.mxu0 %v396
        %472 = vmatpush1.msra.mxu0 %v395
        %473 = vmatprep.subr.mxu0 %v398
        %474 = vmatpush1.msra.mxu0 %v397
        %475 = vmatprep.subr.mxu0 %v400
        %476 = vmatpush1.msra.mxu0 %v399
        %477 = vmatprep.subr.mxu0 %v402
        %478 = vmatpush1.msra.mxu0 %v401
        %479 = vmatprep.subr.mxu0 %v404
        %480 = vmatpush1.msra.mxu0 %v403
        %481 = vmatprep.subr.mxu0 %v406
        %482 = vmatpush1.msra.mxu0 %v405
        %483 = vmatprep.mubr.f32.mxu0 %v336
        %484 = vmatmul.mubr.f32.gmra.mrb[0].mxu0 %v335
        %v485 = vpop.f32.mrb[0].mxu0
        %v486 = vadd.f32 %v412, %v485
        %v487 = vpop.f32.mrb[0].mxu0
        %v488 = vadd.f32 %v416, %v487
        %489 = vmatprep.mubr.f32.mxu0 %v338
        %490 = vmatmul.mubr.f32.gmra.mrb[0].mxu0 %v337
        %v491 = vpop.f32.mrb[0].mxu0
        %v492 = vadd.f32 %v412, %v491
        %v493 = vpop.f32.mrb[0].mxu0
        %v494 = vadd.f32 %v416, %v493
        %495 = vmatprep.mubr.f32.mxu0 %v340
        %496 = vmatmul.mubr.f32.gmra.mrb[0].mxu0 %v339
        %v497 = vpop.f32.mrb[0].mxu0
        %v498 = vadd.f32 %v412, %v497
        %v499 = vpop.f32.mrb[0].mxu0
        %v500 = vadd.f32 %v416, %v499
        %501 = vmatprep.mubr.f32.mxu0 %v342
        %502 = vmatmul.mubr.f32.gmra.mrb[0].mxu0 %v341
        %v503 = vpop.f32.mrb[0].mxu0
        %v504 = vadd.f32 %v412, %v503
        %v505 = vpop.f32.mrb[0].mxu0
        %v506 = vadd.f32 %v416, %v505
        %507 = vdwg.mxu0
        %v508 = vld [vmem:[#allocation7] sm:$0xff]
        %v509 = vld [vmem:[#allocation7 + $0x8] sm:$0xff]
        %v510 = vld [vmem:[#allocation7 + $0x10] sm:$0xff]
        %v511 = vld [vmem:[#allocation7 + $0x18] sm:$0xff]
        %v512 = vld [vmem:[#allocation7 + $0x20] sm:$0xff]
        %v513 = vld [vmem:[#allocation7 + $0x28] sm:$0xff]
        %v514 = vld [vmem:[#allocation7 + $0x30] sm:$0xff]
        %v515 = vld [vmem:[#allocation7 + $0x38] sm:$0xff]
        %v516 = vld [vmem:[#allocation7 + $0x40] sm:$0xff]
        %v517 = vld [vmem:[#allocation7 + $0x48] sm:$0xff]
        %v518 = vld [vmem:[#allocation7 + $0x50] sm:$0xff]
        %v519 = vld [vmem:[#allocation7 + $0x58] sm:$0xff]
        %v520 = vld [vmem:[#allocation7 + $0x60] sm:$0xff]
        %v521 = vld [vmem:[#allocation7 + $0x68] sm:$0xff]
        %v522 = vld [vmem:[#allocation7 + $0x70] sm:$0xff]
        %v523 = vld [vmem:[#allocation7 + $0x78] sm:$0xff]
        %v524 = vld [vmem:[#allocation7 + $0x80] sm:$0xff]
        %v525 = vld [vmem:[#allocation7 + $0x88] sm:$0xff]
        %v526 = vld [vmem:[#allocation7 + $0x90] sm:$0xff]
        %v527 = vld [vmem:[#allocation7 + $0x98] sm:$0xff]
        %v528 = vld [vmem:[#allocation7 + $0xa0] sm:$0xff]
        %v529 = vld [vmem:[#allocation7 + $0xa8] sm:$0xff]
        %v530 = vld [vmem:[#allocation7 + $0xb0] sm:$0xff]
        %v531 = vld [vmem:[#allocation7 + $0xb8] sm:$0xff]
        %v532 = vld [vmem:[#allocation7 + $0xc0] sm:$0xff]
        %v533 = vld [vmem:[#allocation7 + $0xc8] sm:$0xff]
        %v534 = vld [vmem:[#allocation7 + $0xd0] sm:$0xff]
        %v535 = vld [vmem:[#allocation7 + $0xd8] sm:$0xff]
        %v536 = vld [vmem:[#allocation7 + $0xe0] sm:$0xff]
        %v537 = vld [vmem:[#allocation7 + $0xe8] sm:$0xff]
        %v538 = vld [vmem:[#allocation7 + $0xf0] sm:$0xff]
        %v539 = vld [vmem:[#allocation7 + $0xf8] sm:$0xff]
        %v540 = vld [vmem:[#allocation7 + $0x100] sm:$0xff]
        %v541 = vld [vmem:[#allocation7 + $0x108] sm:$0xff]
        %v542 = vld [vmem:[#allocation7 + $0x110] sm:$0xff]
        %v543 = vld [vmem:[#allocation7 + $0x118] sm:$0xff]
        %v544 = vld [vmem:[#allocation7 + $0x120] sm:$0xff]
        %v545 = vld [vmem:[#allocation7 + $0x128] sm:$0xff]
        %v546 = vld [vmem:[#allocation7 + $0x130] sm:$0xff]
        %v547 = vld [vmem:[#allocation7 + $0x138] sm:$0xff]
        %v548 = vld [vmem:[#allocation7 + $0x140] sm:$0xff]
        %v549 = vld [vmem:[#allocation7 + $0x148] sm:$0xff]
        %v550 = vld [vmem:[#allocation7 + $0x150] sm:$0xff]
        %v551 = vld [vmem:[#allocation7 + $0x158] sm:$0xff]
        %v552 = vld [vmem:[#allocation7 + $0x160] sm:$0xff]
        %v553 = vld [vmem:[#allocation7 + $0x168] sm:$0xff]
        %v554 = vld [vmem:[#allocation7 + $0x170] sm:$0xff]
        %v555 = vld [vmem:[#allocation7 + $0x178] sm:$0xff]
        %v556 = vld [vmem:[#allocation7 + $0x180] sm:$0xff]
        %v557 = vld [vmem:[#allocation7 + $0x188] sm:$0xff]
        %v558 = vld [vmem:[#allocation7 + $0x190] sm:$0xff]
        %v559 = vld [vmem:[#allocation7 + $0x198] sm:$0xff]
        %v560 = vld [vmem:[#allocation7 + $0x1a0] sm:$0xff]
        %v561 = vld [vmem:[#allocation7 + $0x1a8] sm:$0xff]
        %v562 = vld [vmem:[#allocation7 + $0x1b0] sm:$0xff]
        %v563 = vld [vmem:[#allocation7 + $0x1b8] sm:$0xff]
        %v564 = vld [vmem:[#allocation7 + $0x1c0] sm:$0xff]
        %v565 = vld [vmem:[#allocation7 + $0x1c8] sm:$0xff]
        %v566 = vld [vmem:[#allocation7 + $0x1d0] sm:$0xff]
        %v567 = vld [vmem:[#allocation7 + $0x1d8] sm:$0xff]
        %v568 = vld [vmem:[#allocation7 + $0x1e0] sm:$0xff]
        %v569 = vld [vmem:[#allocation7 + $0x1e8] sm:$0xff]
        %v570 = vld [vmem:[#allocation7 + $0x1f0] sm:$0xff]
        %v571 = vld [vmem:[#allocation7 + $0x1f8] sm:$0xff]
        %572 = vmatprep.subr.mxu0 %v509
        %573 = vmatpush1.msra.mxu0 %v508
        %574 = vmatprep.subr.mxu0 %v511
        %575 = vmatpush1.msra.mxu0 %v510
        %576 = vmatprep.subr.mxu0 %v513
        %577 = vmatpush1.msra.mxu0 %v512
        %578 = vmatprep.subr.mxu0 %v515
        %579 = vmatpush1.msra.mxu0 %v514
        %580 = vmatprep.subr.mxu0 %v517
        %581 = vmatpush1.msra.mxu0 %v516
        %582 = vmatprep.subr.mxu0 %v519
        %583 = vmatpush1.msra.mxu0 %v518
        %584 = vmatprep.subr.mxu0 %v521
        %585 = vmatpush1.msra.mxu0 %v520
        %586 = vmatprep.subr.mxu0 %v523
        %587 = vmatpush1.msra.mxu0 %v522
        %588 = vmatprep.subr.mxu0 %v525
        %589 = vmatpush1.msra.mxu0 %v524
        %590 = vmatprep.subr.mxu0 %v527
        %591 = vmatpush1.msra.mxu0 %v526
        %592 = vmatprep.subr.mxu0 %v529
        %593 = vmatpush1.msra.mxu0 %v528
        %594 = vmatprep.subr.mxu0 %v531
        %595 = vmatpush1.msra.mxu0 %v530
        %596 = vmatprep.subr.mxu0 %v533
        %597 = vmatpush1.msra.mxu0 %v532
        %598 = vmatprep.subr.mxu0 %v535
        %599 = vmatpush1.msra.mxu0 %v534
        %600 = vmatprep.subr.mxu0 %v537
        %601 = vmatpush1.msra.mxu0 %v536
        %602 = vmatprep.subr.mxu0 %v539
        %603 = vmatpush1.msra.mxu0 %v538
        %604 = vmatprep.subr.mxu0 %v541
        %605 = vmatpush1.msra.mxu0 %v540
        %606 = vmatprep.subr.mxu0 %v543
        %607 = vmatpush1.msra.mxu0 %v542
        %608 = vmatprep.subr.mxu0 %v545
        %609 = vmatpush1.msra.mxu0 %v544
        %610 = vmatprep.subr.mxu0 %v547
        %611 = vmatpush1.msra.mxu0 %v546
        %612 = vmatprep.subr.mxu0 %v549
        %613 = vmatpush1.msra.mxu0 %v548
        %614 = vmatprep.subr.mxu0 %v551
        %615 = vmatpush1.msra.mxu0 %v550
        %616 = vmatprep.subr.mxu0 %v553
        %617 = vmatpush1.msra.mxu0 %v552
        %618 = vmatprep.subr.mxu0 %v555
        %619 = vmatpush1.msra.mxu0 %v554
        %620 = vmatprep.subr.mxu0 %v557
        %621 = vmatpush1.msra.mxu0 %v556
        %622 = vmatprep.subr.mxu0 %v559
        %623 = vmatpush1.msra.mxu0 %v558
        %624 = vmatprep.subr.mxu0 %v561
        %625 = vmatpush1.msra.mxu0 %v560
        %626 = vmatprep.subr.mxu0 %v563
        %627 = vmatpush1.msra.mxu0 %v562
        %628 = vmatprep.subr.mxu0 %v565
        %629 = vmatpush1.msra.mxu0 %v564
        %630 = vmatprep.subr.mxu0 %v567
        %631 = vmatpush1.msra.mxu0 %v566
        %632 = vmatprep.subr.mxu0 %v569
        %633 = vmatpush1.msra.mxu0 %v568
        %634 = vmatprep.subr.mxu0 %v571
        %635 = vmatpush1.msra.mxu0 %v570
        %636 = vmatprep.mubr.f32.mxu0 %v488
        %637 = vmatmul.mubr.f32.gmra.mrb[0].mxu0 %v486
        %v638 = vpop.f32.mrb[0].mxu0
        %v639 = vadd.f32 0.0, %v638
        %v640 = vpop.f32.mrb[0].mxu0
        %v641 = vadd.f32 0.0, %v640
        %642 = vmatprep.mubr.f32.mxu0 %v494
        %643 = vmatmul.mubr.f32.gmra.mrb[0].mxu0 %v492
        %v644 = vpop.f32.mrb[0].mxu0
        %v645 = vadd.f32 0.0, %v644
        %v646 = vpop.f32.mrb[0].mxu0
        %v647 = vadd.f32 0.0, %v646
        %648 = vmatprep.mubr.f32.mxu0 %v500
        %649 = vmatmul.mubr.f32.gmra.mrb[0].mxu0 %v498
        %v650 = vpop.f32.mrb[0].mxu0
        %v651 = vadd.f32 0.0, %v650
        %v652 = vpop.f32.mrb[0].mxu0
        %v653 = vadd.f32 0.0, %v652
        %654 = vmatprep.mubr.f32.mxu0 %v506
        %655 = vmatmul.mubr.f32.gmra.mrb[0].mxu0 %v504
        %v656 = vpop.f32.mrb[0].mxu0
        %v657 = vadd.f32 0.0, %v656
        %v658 = vpop.f32.mrb[0].mxu0
        %v659 = vadd.f32 0.0, %v658
        %660 = vdwg.mxu0
        %v661 = vmul.f32 %v486, %v486
        %v662 = vmul.f32 %v488, %v488
        %v663 = vmul.f32 %v492, %v492
        %v664 = vmul.f32 %v494, %v494
        %v665 = vmul.f32 %v498, %v498
        %v666 = vmul.f32 %v500, %v500
        %v667 = vmul.f32 %v504, %v504
        %v668 = vmul.f32 %v506, %v506
        %669 = vmatprep.subr.mxu0 %v509
        %670 = vmatpush1.msra.mxu0 %v508
        %671 = vmatprep.subr.mxu0 %v511
        %672 = vmatpush1.msra.mxu0 %v510
        %673 = vmatprep.subr.mxu0 %v513
        %674 = vmatpush1.msra.mxu0 %v512
        %675 = vmatprep.subr.mxu0 %v515
        %676 = vmatpush1.msra.mxu0 %v514
        %677 = vmatprep.subr.mxu0 %v517
        %678 = vmatpush1.msra.mxu0 %v516
        %679 = vmatprep.subr.mxu0 %v519
        %680 = vmatpush1.msra.mxu0 %v518
        %681 = vmatprep.subr.mxu0 %v521
        %682 = vmatpush1.msra.mxu0 %v520
        %683 = vmatprep.subr.mxu0 %v523
        %684 = vmatpush1.msra.mxu0 %v522
        %685 = vmatprep.subr.mxu0 %v525
        %686 = vmatpush1.msra.mxu0 %v524
        %687 = vmatprep.subr.mxu0 %v527
        %688 = vmatpush1.msra.mxu0 %v526
        %689 = vmatprep.subr.mxu0 %v529
        %690 = vmatpush1.msra.mxu0 %v528
        %691 = vmatprep.subr.mxu0 %v531
        %692 = vmatpush1.msra.mxu0 %v530
        %693 = vmatprep.subr.mxu0 %v533
        %694 = vmatpush1.msra.mxu0 %v532
        %695 = vmatprep.subr.mxu0 %v535
        %696 = vmatpush1.msra.mxu0 %v534
        %697 = vmatprep.subr.mxu0 %v537
        %698 = vmatpush1.msra.mxu0 %v536
        %699 = vmatprep.subr.mxu0 %v539
        %700 = vmatpush1.msra.mxu0 %v538
        %701 = vmatprep.subr.mxu0 %v541
        %702 = vmatpush1.msra.mxu0 %v540
        %703 = vmatprep.subr.mxu0 %v543
        %704 = vmatpush1.msra.mxu0 %v542
        %705 = vmatprep.subr.mxu0 %v545
        %706 = vmatpush1.msra.mxu0 %v544
        %707 = vmatprep.subr.mxu0 %v547
        %708 = vmatpush1.msra.mxu0 %v546
        %709 = vmatprep.subr.mxu0 %v549
        %710 = vmatpush1.msra.mxu0 %v548
        %711 = vmatprep.subr.mxu0 %v551
        %712 = vmatpush1.msra.mxu0 %v550
        %713 = vmatprep.subr.mxu0 %v553
        %714 = vmatpush1.msra.mxu0 %v552
        %715 = vmatprep.subr.mxu0 %v555
        %716 = vmatpush1.msra.mxu0 %v554
        %717 = vmatprep.subr.mxu0 %v557
        %718 = vmatpush1.msra.mxu0 %v556
        %719 = vmatprep.subr.mxu0 %v559
        %720 = vmatpush1.msra.mxu0 %v558
        %721 = vmatprep.subr.mxu0 %v561
        %722 = vmatpush1.msra.mxu0 %v560
        %723 = vmatprep.subr.mxu0 %v563
        %724 = vmatpush1.msra.mxu0 %v562
        %725 = vmatprep.subr.mxu0 %v565
        %726 = vmatpush1.msra.mxu0 %v564
        %727 = vmatprep.subr.mxu0 %v567
        %728 = vmatpush1.msra.mxu0 %v566
        %729 = vmatprep.subr.mxu0 %v569
        %730 = vmatpush1.msra.mxu0 %v568
        %731 = vmatprep.subr.mxu0 %v571
        %732 = vmatpush1.msra.mxu0 %v570
        %733 = vmatprep.mubr.f32.mxu0 %v662
        %734 = vmatmul.mubr.f32.gmra.mrb[0].mxu0 %v661
        %v735 = vpop.f32.mrb[0].mxu0
        %v736 = vadd.f32 0.0, %v735
        %v737 = vpop.f32.mrb[0].mxu0
        %v738 = vadd.f32 0.0, %v737
        %739 = vmatprep.mubr.f32.mxu0 %v664
        %740 = vmatmul.mubr.f32.gmra.mrb[0].mxu0 %v663
        %v741 = vpop.f32.mrb[0].mxu0
        %v742 = vadd.f32 0.0, %v741
        %v743 = vpop.f32.mrb[0].mxu0
        %v744 = vadd.f32 0.0, %v743
        %745 = vmatprep.mubr.f32.mxu0 %v666
        %746 = vmatmul.mubr.f32.gmra.mrb[0].mxu0 %v665
        %v747 = vpop.f32.mrb[0].mxu0
        %v748 = vadd.f32 0.0, %v747
        %v749 = vpop.f32.mrb[0].mxu0
        %v750 = vadd.f32 0.0, %v749
        %751 = vmatprep.mubr.f32.mxu0 %v668
        %752 = vmatmul.mubr.f32.gmra.mrb[0].mxu0 %v667
        %v753 = vpop.f32.mrb[0].mxu0
        %v754 = vadd.f32 0.0, %v753
        %v755 = vpop.f32.mrb[0].mxu0
        %v756 = vadd.f32 0.0, %v755
        %757 = vdwg.mxu0
        %v758 = vmul.f32 %v639, %v639
        %v759 = vmul.f32 %v641, %v641
        %v760 = vmul.f32 %v645, %v645
        %v761 = vmul.f32 %v647, %v647
        %v762 = vmul.f32 %v651, %v651
        %v763 = vmul.f32 %v653, %v653
        %v764 = vmul.f32 %v657, %v657
        %v765 = vmul.f32 %v659, %v659
        %v766 = vsub.f32 %v736, %v758
        %v767 = vsub.f32 %v738, %v759
        %v768 = vsub.f32 %v742, %v760
        %v769 = vsub.f32 %v744, %v761
        %v770 = vsub.f32 %v748, %v762
        %v771 = vsub.f32 %v750, %v763
        %v772 = vsub.f32 %v754, %v764
        %v773 = vsub.f32 %v756, %v765
        %v774 = vsub.f32 %v486, %v639
        %v775 = vsub.f32 %v488, %v641
        %v776 = vsub.f32 %v492, %v645
        %v777 = vsub.f32 %v494, %v647
        %v778 = vsub.f32 %v498, %v651
        %v779 = vsub.f32 %v500, %v653
        %v780 = vsub.f32 %v504, %v657
        %v781 = vsub.f32 %v506, %v659
        %v782 = vadd.f32 %v766, 1e-05
        %v783 = vadd.f32 %v767, 1e-05
        %v784 = vadd.f32 %v768, 1e-05
        %v785 = vadd.f32 %v769, 1e-05
        %v786 = vadd.f32 %v770, 1e-05
        %v787 = vadd.f32 %v771, 1e-05
        %v788 = vadd.f32 %v772, 1e-05
        %v789 = vadd.f32 %v773, 1e-05
        %v790 = vrsqrt.pop %v782
        %v791 = vrsqrt.pop %v783
        %v792 = vrsqrt.pop %v784
        %v793 = vrsqrt.pop %v785
        %v794 = vrsqrt.pop %v786
        %v795 = vrsqrt.pop %v787
        %v796 = vrsqrt.pop %v788
        %v797 = vrsqrt.pop %v789
        %v798 = vmul.f32 %v774, %v790
        %v799 = vmul.f32 %v775, %v791
        %v800 = vmul.f32 %v776, %v792
        %v801 = vmul.f32 %v777, %v793
        %v802 = vmul.f32 %v778, %v794
        %v803 = vmul.f32 %v779, %v795
        %v804 = vmul.f32 %v780, %v796
        %v805 = vmul.f32 %v781, %v797
        %v806 = vld [vmem:[#allocation8] sm:$0xff]
        %v807 = vld [vmem:[#allocation8 + $0x8] sm:$0xff]
        %v808 = vld [vmem:[#allocation8 + $0x10] sm:$0xff]
        %v809 = vld [vmem:[#allocation8 + $0x18] sm:$0xff]
        %v810 = vld [vmem:[#allocation8 + $0x20] sm:$0xff]
        %v811 = vld [vmem:[#allocation8 + $0x28] sm:$0xff]
        %v812 = vld [vmem:[#allocation8 + $0x30] sm:$0xff]
        %v813 = vld [vmem:[#allocation8 + $0x38] sm:$0xff]
        %v814 = vld [vmem:[#allocation8 + $0x40] sm:$0xff]
        %v815 = vld [vmem:[#allocation8 + $0x48] sm:$0xff]
        %v816 = vld [vmem:[#allocation8 + $0x50] sm:$0xff]
        %v817 = vld [vmem:[#allocation8 + $0x58] sm:$0xff]
        %v818 = vld [vmem:[#allocation8 + $0x60] sm:$0xff]
        %v819 = vld [vmem:[#allocation8 + $0x68] sm:$0xff]
        %v820 = vld [vmem:[#allocation8 + $0x70] sm:$0xff]
        %v821 = vld [vmem:[#allocation8 + $0x78] sm:$0xff]
        %v822 = vld [vmem:[#allocation8 + $0x80] sm:$0xff]
        %v823 = vld [vmem:[#allocation8 + $0x88] sm:$0xff]
        %v824 = vld [vmem:[#allocation8 + $0x90] sm:$0xff]
        %v825 = vld [vmem:[#allocation8 + $0x98] sm:$0xff]
        %v826 = vld [vmem:[#allocation8 + $0xa0] sm:$0xff]
        %v827 = vld [vmem:[#allocation8 + $0xa8] sm:$0xff]
        %v828 = vld [vmem:[#allocation8 + $0xb0] sm:$0xff]
        %v829 = vld [vmem:[#allocation8 + $0xb8] sm:$0xff]
        %v830 = vld [vmem:[#allocation8 + $0xc0] sm:$0xff]
        %v831 = vld [vmem:[#allocation8 + $0xc8] sm:$0xff]
        %v832 = vld [vmem:[#allocation8 + $0xd0] sm:$0xff]
        %v833 = vld [vmem:[#allocation8 + $0xd8] sm:$0xff]
        %v834 = vld [vmem:[#allocation8 + $0xe0] sm:$0xff]
        %v835 = vld [vmem:[#allocation8 + $0xe8] sm:$0xff]
        %v836 = vld [vmem:[#allocation8 + $0xf0] sm:$0xff]
        %v837 = vld [vmem:[#allocation8 + $0xf8] sm:$0xff]
        %v838 = vld [vmem:[%s5] sm:$0x1]
        %v840 = vlaneseq
        %v841 = vshrl.u32 %v840, 7
        %v842 = vsub.s32 0, %v841
        %v843 = vrot.slane %v838, %v842
        %845 = vmatprep.subr.mxu0 0.0
        %846 = vmatpush1.msra.mxu0 %v806
        %847 = vmatprep.subr.mxu0 0.0
        %848 = vmatpush1.msra.mxu0 %v807
        %849 = vmatprep.subr.mxu0 0.0
        %850 = vmatpush1.msra.mxu0 %v808
        %851 = vmatprep.subr.mxu0 0.0
        %852 = vmatpush1.msra.mxu0 %v809
        %853 = vmatprep.subr.mxu0 0.0
        %854 = vmatpush1.msra.mxu0 %v810
        %855 = vmatprep.subr.mxu0 0.0
        %856 = vmatpush1.msra.mxu0 %v811
        %857 = vmatprep.subr.mxu0 0.0
        %858 = vmatpush1.msra.mxu0 %v812
        %859 = vmatprep.subr.mxu0 0.0
        %860 = vmatpush1.msra.mxu0 %v813
        %861 = vmatprep.subr.mxu0 0.0
        %862 = vmatpush1.msra.mxu0 %v814
        %863 = vmatprep.subr.mxu0 0.0
        %864 = vmatpush1.msra.mxu0 %v815
        %865 = vmatprep.subr.mxu0 0.0
        %866 = vmatpush1.msra.mxu0 %v816
        %867 = vmatprep.subr.mxu0 0.0
        %868 = vmatpush1.msra.mxu0 %v817
        %869 = vmatprep.subr.mxu0 0.0
        %870 = vmatpush1.msra.mxu0 %v818
        %871 = vmatprep.subr.mxu0 0.0
        %872 = vmatpush1.msra.mxu0 %v819
        %873 = vmatprep.subr.mxu0 0.0
        %874 = vmatpush1.msra.mxu0 %v820
        %875 = vmatprep.subr.mxu0 0.0
        %876 = vmatpush1.msra.mxu0 %v821
        %877 = vmatprep.subr.mxu0 0.0
        %878 = vmatpush1.msra.mxu0 %v822
        %879 = vmatprep.subr.mxu0 0.0
        %880 = vmatpush1.msra.mxu0 %v823
        %881 = vmatprep.subr.mxu0 0.0
        %882 = vmatpush1.msra.mxu0 %v824
        %883 = vmatprep.subr.mxu0 0.0
        %884 = vmatpush1.msra.mxu0 %v825
        %885 = vmatprep.subr.mxu0 0.0
        %886 = vmatpush1.msra.mxu0 %v826
        %887 = vmatprep.subr.mxu0 0.0
        %888 = vmatpush1.msra.mxu0 %v827
        %889 = vmatprep.subr.mxu0 0.0
        %890 = vmatpush1.msra.mxu0 %v828
        %891 = vmatprep.subr.mxu0 0.0
        %892 = vmatpush1.msra.mxu0 %v829
        %893 = vmatprep.subr.mxu0 0.0
        %894 = vmatpush1.msra.mxu0 %v830
        %895 = vmatprep.subr.mxu0 0.0
        %896 = vmatpush1.msra.mxu0 %v831
        %897 = vmatprep.subr.mxu0 0.0
        %898 = vmatpush1.msra.mxu0 %v832
        %899 = vmatprep.subr.mxu0 0.0
        %900 = vmatpush1.msra.mxu0 %v833
        %901 = vmatprep.subr.mxu0 0.0
        %902 = vmatpush1.msra.mxu0 %v834
        %903 = vmatprep.subr.mxu0 0.0
        %904 = vmatpush1.msra.mxu0 %v835
        %905 = vmatprep.subr.mxu0 0.0
        %906 = vmatpush1.msra.mxu0 %v836
        %907 = vmatprep.subr.mxu0 0.0
        %908 = vmatpush1.msra.mxu0 %v837
        %909 = vmatprep.mubr.f32.mxu0 %v799
        %910 = vmatmul.mubr.f32.gmra.mrb[0].mxu0 %v798
        %v911 = vpop.f32.mrb[0].mxu0
        %v912 = vadd.f32 %v843, %v911
        %v913 = vpop.f32.mrb[0].mxu0
        %914 = vmatprep.mubr.f32.mxu0 %v801
        %915 = vmatmul.mubr.f32.gmra.mrb[0].mxu0 %v800
        %v916 = vpop.f32.mrb[0].mxu0
        %v917 = vadd.f32 %v843, %v916
        %v918 = vpop.f32.mrb[0].mxu0
        %919 = vmatprep.mubr.f32.mxu0 %v803
        %920 = vmatmul.mubr.f32.gmra.mrb[0].mxu0 %v802
        %v921 = vpop.f32.mrb[0].mxu0
        %v922 = vadd.f32 %v843, %v921
        %v923 = vpop.f32.mrb[0].mxu0
        %924 = vmatprep.mubr.f32.mxu0 %v805
        %925 = vmatmul.mubr.f32.gmra.mrb[0].mxu0 %v804
        %v926 = vpop.f32.mrb[0].mxu0
        %v927 = vadd.f32 %v843, %v926
        %v928 = vpop.f32.mrb[0].mxu0
        %929 = vdwg.mxu0
        %930 = vst [vmem:[%s332] sm:$0xff] %v912
        %931 = vst [vmem:[%s332 + $0x8] sm:$0xff] %v917
        %932 = vst [vmem:[%s332 + $0x10] sm:$0xff] %v922
        %933 = vst [vmem:[%s332 + $0x18] sm:$0xff] %v927
        %s934 = sand.u32 %s180, 1
        %s935 = scalar_lea.sflag [#allocation4], %s934
        %s936 = sand.u32 %s180, 1
        %s937 = smul.addr %s936, 32
        %s938 = scalar_lea.vmem [#allocation10], %s937
        // Predicated region
        $region61: #{tpu_custom_call.1} parent=43 // pred_check
          %p939 = pneg %p190
        $region62: #{tpu_custom_call.1} parent=43 // pred_check_branch
          %941 = sbr.rel (%p939) target = $region64
        $region63: #{tpu_custom_call.1} parent=43 // pred_region
          %s942 = smul.u32 4, %s30
          %s944 = ssub.s32 512, 512
          %945 = vsyncadd %s935, %s944
          %s946 = smul.addr %s29, 4
          %s947 = sadd.s32 %s942, %s946
          %s948 = smul.addr %s947, 128
          %s949 = scalar_lea.hbm %s6, %s948
          %s950 = sshll.u32 %s938, 4
          %s951 = int_to_ptr.vmem [resolvable:$true] %s950
          %956 = dma.vmem_to_hbm [thread:$0]  %s951, 512, %s949, %s935, 128, 128, 8
        $region64: #{tpu_custom_call.1} parent=43 // pred_fallthru
          _
      $region44: #{tpu_custom_call.1} parent=5 // pred_fallthru
        _
      %p957 = scmp.le.s32.totalorder 2, %s20
      // Predicated region
      $region65: #{tpu_custom_call.1} parent=5 // pred_check
        %p958 = pneg %p957
      $region66: #{tpu_custom_call.1} parent=5 // pred_check_branch
        %960 = sbr.rel (%p958) target = $region68
      $region67: #{tpu_custom_call.1} parent=5 // pred_region
        %s961 = ssub.s32 %s20, 2
        // Predicated region
        $region69: #{tpu_custom_call.1} parent=67 // pred_check
          %p962 = pneg %p196
        $region70: #{tpu_custom_call.1} parent=67 // pred_check_branch
          %964 = sbr.rel (%p962) target = $region72
        $region71: #{tpu_custom_call.1} parent=67 // pred_region
          %s965 = sand.u32 %s181, 1
          %s966 = scalar_lea.sflag [#allocation4], %s965
          %s967 = sand.u32 %s181, 1
          %s968 = smul.addr %s967, 32
          %s969 = scalar_lea.vmem [#allocation10], %s968
          %970 = dma.done %s966, 512
        $region72: #{tpu_custom_call.1} parent=67 // pred_fallthru
          _
      $region68: #{tpu_custom_call.1} parent=5 // pred_fallthru
        _
    $region6: #{tpu_custom_call.1} parent=1 // loop_footer
      %s24 = sadd.s32 1, %s20
    $region7: #{tpu_custom_call.1} parent=1 // loop_footer_branch
      %19 = sbr.rel target = $region3
    $region8: #{tpu_custom_call.1} parent=1 // loop_exit
      _
    %971 = vsyncpa [#allocation3], 1
    %s972 = scalar_lea.sflag [#allocation3], 1
    %973 = vsyncpa %s972, 1
    %974 = vsyncpa [#allocation6], 1
    %975 = vsyncpa [#allocation9], 1
    %976 = vsyncpa [#allocation4], 1
    %s977 = scalar_lea.sflag [#allocation4], 1
    %978 = vsyncpa %s977, 1

</llo_original>
